<compile_context>
chip_gen: v7x
topology: tpu7x:2x2x1
jax: 0.10.0
libtpu: 0.0.40
codegen_flags: <defaults>
</compile_context>

<pallas_src>
import functools

import jax
import jax.numpy as jnp
from jax import lax
from jax.experimental import pallas as pl
from jax.experimental.pallas import tpu as pltpu


@functools.lru_cache(maxsize=None)
def _pltpu_roll_sign():
    """Probe pltpu.roll's rotation direction once (cheap, cached).

    Returns -1 if pltpu.roll matches jnp.roll (result[i] = x[i - shift]) and +1
    for the opposite convention, so the statically derived 3x3 shift amounts in
    the main kernel are correct either way.
    """
    def probe(x_ref, o_ref):
        o_ref[...] = pltpu.roll(x_ref[...], 1, axis=0)

    x = lax.broadcasted_iota(jnp.float32, (8, 128), 0)
    y = pl.pallas_call(
        probe, out_shape=jax.ShapeDtypeStruct((8, 128), jnp.float32))(x)
    return -1 if int(y[1, 0]) == 0 else 1


def _vmem_capacity_bytes():
    try:
        return int(pltpu.get_tpu_info().vmem_capacity_bytes)
    except Exception:
        return 64 * 1024 * 1024  # v7x-safe fallback


def _bottleneck_kernel(x_ref, w1_ref, b1_ref, w2_ref, b2_ref, w3_ref, b3_ref,
                       o_ref, *, H, W, roll_sign, mxu_dtype):
    # x_ref: (nb, H*W, C) block holding `nb` whole images.
    nb, HW, C = x_ref.shape
    Ch = w1_ref.shape[1]
    M = nb * HW

    x_f32 = x_ref[...].reshape(M, C)                          # (M, C) f32, free reshape

    # ---- conv1: 1x1 conv (folded BN) + ReLU => one MXU matmul ----
    h1 = jnp.dot(x_f32.astype(mxu_dtype), w1_ref[...],
                 preferred_element_type=jnp.float32)
    h1 = jnp.maximum(h1 + b1_ref[...], 0.0)                   # (M, Ch) f32
    # Cast ONCE to the MXU dtype: all rolls / boundary selects / the lane concat
    # below run on bf16 operands (half the XLU tile ops and vreg footprint, and
    # no later full-width patch cast).
    h1_mxu = h1.astype(mxu_dtype)

    # ---- conv2: 3x3 conv, pad=1 (folded BN) + ReLU as ONE im2col matmul ----
    # The nine taps are shifted views of h1 along the flattened pixel axis
    # (shift = dy*W + dx).  Out-of-image pixels (including cross-row and
    # cross-image wraparound) are masked to zero, reproducing the zero padding.
    # Boundary predicates are int32-based and hoisted (computed once, reused).
    pix = lax.broadcasted_iota(jnp.int32, (M, 1), 0)
    py = (pix // W) % H                                        # row within image
    px = pix % W                                               # col within image
    not_top = py >= 1
    not_bot = py < H - 1
    not_left = px >= 1
    not_right = px < W - 1
    zero_tap = jnp.zeros_like(h1_mxu)

    taps = []
    for dy in (-1, 0, 1):
        for dx in (-1, 0, 1):
            off = dy * W + dx
            if off == 0:
                tap = h1_mxu
            else:
                # TODO(synk): for general W, prefer W a multiple of 8 (or pad
                # rows) so the +/-W rolls stay sublane-tile-aligned.
                tap = pltpu.roll(h1_mxu, (roll_sign * off) % M, axis=0)
            ok = None
            if dy == -1:
                ok = not_top
            elif dy == 1:
                ok = not_bot
            if dx == -1:
                ok = not_left if ok is None else (ok & not_left)
            elif dx == 1:
                ok = not_right if ok is None else (ok & not_right)
            if ok is not None:
                tap = jnp.where(ok, tap, zero_tap)
            taps.append(tap)
    patch = jnp.concatenate(taps, axis=-1)                     # (M, 9*Ch) bf16

    h2 = jnp.dot(patch, w2_ref[...], preferred_element_type=jnp.float32)
    h2 = jnp.maximum(h2 + b2_ref[...], 0.0)                    # (M, Ch) f32

    # ---- conv3: 1x1 conv (folded BN), no activation ----
    h3 = jnp.dot(h2.astype(mxu_dtype), w3_ref[...],
                 preferred_element_type=jnp.float32) + b3_ref[...]

    # ---- residual add (exact f32 identity) + ReLU ----
    out = jnp.maximum(h3 + x_f32, 0.0)                         # (M, C)
    # TODO(synk): if a bundle dump shows the half-lane (C=64) store on the
    # critical path, present the output as a lane-dense (nb, HW*C/128, 128) slab.
    o_ref[...] = out.reshape(nb, HW, C).astype(o_ref.dtype)


def _pick_images_per_block(N, HW, C, Ch):
    """VMEM-aware number of whole images per grid step (divisor of N)."""
    vmem_bytes = _vmem_capacity_bytes()
    # Per-image VMEM estimate: double-buffered f32 in/out blocks, bf16 taps +
    # im2col patch, f32 hidden activations and residual temps.
    bytes_per_image = HW * (
        2 * 2 * C * 4            # input + output blocks, 2-deep pipelined, f32
        + 2 * 9 * Ch * 2         # bf16 rolled taps + concatenated patch
        + 2 * Ch * 4             # h1 / h2 in f32
        + 2 * C * 4)             # h3 + residual temp in f32
    budget = vmem_bytes // 4     # generation-aware: ~16 MiB/step on v7x, 32 MiB on v5e/v6e
    nb = max(1, min(N, budget // max(bytes_per_image, 1)))
    if N >= 2:
        # Keep >= 2 grid steps so both v7x TensorCores get work and the
        # BlockSpec pipeline actually overlaps DMA with compute.
        nb = max(1, min(nb, N // 2))
    while N % nb:                # block shape must tile the batch exactly
        nb -= 1
    return nb


def bottleneck_pallas(x_nhwc, w1, b1, w2, b2, w3, b3, *, images_per_block=None):
    """x_nhwc: (N, H, W, C) f32.  w1:(C,Ch), w2:(9*Ch,Ch), w3:(Ch,C) in the MXU
    dtype; biases (1,Ch)/(1,C) in f32 (BN already folded)."""
    N, H, W, C = x_nhwc.shape
    Ch = w1.shape[1]
    HW = H * W
    nb = images_per_block or _pick_images_per_block(N, HW, C, Ch)
    assert N % nb == 0, (N, nb)

    # Free reshape (same HBM layout): hand the kernel lane-dense (nb*H*W, C)
    # slabs and skip all H/W handling on the load/store path.
    # TODO(synk): if the surrounding network tolerates it, pass/return bf16 here
    # to halve HBM traffic (residual add stays f32 in-kernel).
    x_flat = x_nhwc.reshape(N, HW, C)

    kernel = functools.partial(
        _bottleneck_kernel, H=H, W=W,
        roll_sign=_pltpu_roll_sign(), mxu_dtype=w1.dtype)

    def _const_spec(shape):
        # Constant-index weight/bias blocks: single-buffered so deep bottlenecks
        # don't burn VMEM on duplicate weight buffers.
        idx_map = lambda n, _shape=shape: tuple(0 for _ in _shape)
        try:
            return pl.BlockSpec(shape, idx_map, pipeline_mode=pl.Buffered(1))
        except (TypeError, AttributeError):
            return pl.BlockSpec(shape, idx_map)

    vmem_limit = int(min(_vmem_capacity_bytes() // 2, 64 * 1024 * 1024))

    out = pl.pallas_call(
        kernel,
        out_shape=jax.ShapeDtypeStruct((N, HW, C), x_nhwc.dtype),
        grid=(N // nb,),
        in_specs=[
            pl.BlockSpec((nb, HW, C), lambda n: (n, 0, 0)),
            _const_spec((C, Ch)),
            _const_spec((1, Ch)),
            _const_spec((9 * Ch, Ch)),
            _const_spec((1, Ch)),
            _const_spec((Ch, C)),
            _const_spec((1, C)),
        ],
        out_specs=pl.BlockSpec((nb, HW, C), lambda n: (n, 0, 0)),
        compiler_params=pltpu.CompilerParams(
            dimension_semantics=("parallel",),
            vmem_limit_bytes=vmem_limit),
        # TODO(synk): for real ResNet feature maps (e.g. 56x56x256), tile H with
        # a 1-row halo instead of whole images; the VMEM-derived nb above only
        # shrinks the image count, it cannot split a single huge image.
    )(x_flat, w1, b1, w2, b2, w3, b3)
    return out.reshape(N, H, W, C)


def fold_bn(w, b, gamma, beta, mean, var, eps=1e-5):
    """Fold eval-mode BatchNorm2d into conv weight (out,in,kh,kw) and bias (out,)."""
    scale = gamma / jnp.sqrt(var + eps)
    w_f = w * scale[:, None, None, None]
    b_f = scale * (b - mean) + beta
    return w_f, b_f


def make_params(key, channel=64, factor=2):
    hid = channel // factor
    ks = jax.random.split(key, 16)
    k = iter(ks)

    def conv_w(key, out_c, in_c, kh, kw):
        return 0.1 * jax.random.normal(key, (out_c, in_c, kh, kw), jnp.float32)

    def bn(key, c):
        g = 1.0 + 0.1 * jax.random.normal(key, (c,), jnp.float32)
        b = 0.05 * jnp.arange(c, dtype=jnp.float32) / c
        m = 0.01 * jnp.arange(c, dtype=jnp.float32) / c
        v = 1.0 + 0.02 * jnp.arange(c, dtype=jnp.float32) / c
        return g, b, m, v

    p = {}
    p["w1"] = conv_w(next(k), hid, channel, 1, 1)
    p["b1"] = 0.01 * jax.random.normal(next(k), (hid,), jnp.float32)
    p["bn1"] = bn(next(k), hid)
    p["w2"] = conv_w(next(k), hid, hid, 3, 3)
    p["b2"] = 0.01 * jax.random.normal(next(k), (hid,), jnp.float32)
    p["bn2"] = bn(next(k), hid)
    p["w3"] = conv_w(next(k), channel, hid, 1, 1)
    p["b3"] = 0.01 * jax.random.normal(next(k), (channel,), jnp.float32)
    p["bn3"] = bn(next(k), channel)
    return p


def prepare_kernel_weights(p, mxu_dtype=jnp.bfloat16):
    """Fold BN (f32), reshape for the NHWC matmul kernel, cast weights to the
    MXU dtype; biases stay f32."""
    w1f, b1f = fold_bn(p["w1"], p["b1"], *p["bn1"])
    w2f, b2f = fold_bn(p["w2"], p["b2"], *p["bn2"])
    w3f, b3f = fold_bn(p["w3"], p["b3"], *p["bn3"])

    C = w1f.shape[1]
    Ch = w1f.shape[0]

    # 1x1 convs -> (in, out) matmul weights
    w1k = jnp.transpose(w1f[:, :, 0, 0], (1, 0)).astype(mxu_dtype)       # (C, Ch)
    w3k = jnp.transpose(w3f[:, :, 0, 0], (1, 0)).astype(mxu_dtype)       # (Ch, C)
    # 3x3 conv -> im2col weight (9*Ch, Ch), rows ordered (ky, kx, ci)
    w2k = jnp.transpose(w2f, (2, 3, 1, 0)).reshape(9 * Ch, Ch).astype(mxu_dtype)

    return (w1k, b1f.reshape(1, Ch).astype(jnp.float32),
            w2k, b2f.reshape(1, Ch).astype(jnp.float32),
            w3k, b3f.reshape(1, C).astype(jnp.float32))


def reference_nhwc(x_nhwc, p):
    """Pure-JAX f32 reference from the *unfolded* parameters (eval-mode BN)."""
    dn = ("NHWC", "HWIO", "NHWC")

    def conv(x, w, b, pad):
        w_hwio = jnp.transpose(w, (2, 3, 1, 0))
        y = lax.conv_general_dilated(x, w_hwio, (1, 1), pad,
                                     dimension_numbers=dn)
        return y + b[None, None, None, :]

    def bn(x, params, eps=1e-5):
        g, b, m, v = params
        return (x - m) * (g / jnp.sqrt(v + eps)) + b

    h = jax.nn.relu(bn(conv(x_nhwc, p["w1"], p["b1"], "VALID"), p["bn1"]))
    h = jax.nn.relu(bn(conv(h, p["w2"], p["b2"], [(1, 1), (1, 1)]), p["bn2"]))
    h = bn(conv(h, p["w3"], p["b3"], "VALID"), p["bn3"])
    return jax.nn.relu(h + x_nhwc)


if __name__ == "__main__":
    key = jax.random.PRNGKey(0)
    k_x, k_p = jax.random.split(key)

    N, C, H, W = 2, 64, 16, 16            # matches BottleNeck(channel=64, factor=2)
    x_nchw = jax.random.normal(k_x, (N, C, H, W), jnp.float32)

    params = make_params(k_p, channel=C, factor=2)
    w1, b1, w2, b2, w3, b3 = prepare_kernel_weights(params, mxu_dtype=jnp.bfloat16)

    x_nhwc = jnp.transpose(x_nchw, (0, 2, 3, 1))            # NCHW -> NHWC
    out_nhwc = bottleneck_pallas(x_nhwc, w1, b1, w2, b2, w3, b3)
    out_nchw = jnp.transpose(out_nhwc, (0, 3, 1, 2))        # NHWC -> NCHW
    jax.block_until_ready(out_nchw)

    ref = jnp.transpose(reference_nhwc(x_nhwc, params), (0, 3, 1, 2))
    assert out_nchw.shape == (N, C, H, W)
    # MXU operands are bf16; tolerance covers bf16 rounding through the three
    # matmuls vs the f32 reference.
    assert jnp.allclose(out_nchw, ref, atol=3e-2, rtol=3e-2), (
        float(jnp.max(jnp.abs(out_nchw - ref))))

    print("KERNEL_OK")
</pallas_src>

<mosaic_0001>
module attributes {stable_mosaic.version = 11 : i64} {
  func.func @probe(%arg0: memref<8x128xf32, #tpu.memory_space<vmem>>, %arg1: memref<8x128xf32, #tpu.memory_space<vmem>>) attributes {dimension_semantics = [], scalar_prefetch = 0 : i64, scratch_operands = 0 : i64, tpu.core_type = #tpu.core_type<tc>} {
    %c0 = arith.constant 0 : index
    %c0_0 = arith.constant 0 : index
    %0 = vector.load %arg0[%c0, %c0_0] : memref<8x128xf32, #tpu.memory_space<vmem>>, vector<8x128xf32>
    %c1_i32 = arith.constant 1 : i32
    %1 = tpu.dynamic_rotate %0 by %c1_i32 dim 0 : vector<8x128xf32>, i32 -> vector<8x128xf32>
    %c0_1 = arith.constant 0 : index
    %c0_2 = arith.constant 0 : index
    %2 = vector.load %arg1[%c0_1, %c0_2] : memref<8x128xf32, #tpu.memory_space<vmem>>, vector<8x128xf32>
    tpu.vector_store %arg1[%c0_1, %c0_2], %1 {strides = array<i32>} : memref<8x128xf32, #tpu.memory_space<vmem>>, vector<8x128xf32>,
    return
  }
}

</mosaic_0001>

<llo_original>
// kernel: tpu_custom_call.1
$region0: #{tpu_custom_call.1}
  #allocation0 [shape = 'u32[]', space=smem, size = 0x4, offset = 0x4, fixed_abs, tag = 'smem constant byte address 0x4 - core index']
  #allocation1 [shape = 'u32[144,128]{1,0:T(1,128)}', space=vmem, size = 0x12000, scoped, tag = 'internal scratch']
  %s0 = inlined_call_operand.hbm [shape: f32[8,128], index: 0, kind: input, shape index: {}]
  %s1 = inlined_call_operand.hbm [shape: f32[8,128], index: 1, kind: output, shape index: {}]
  %s2 = sld [smem:[#allocation0]]
  $region18: #{tpu_custom_call.1} parent=0
    _
  %s4 = ssub.s32 1, %s2
  %s5 = scalar_select 0, %s4, %s2
  $region1: #{tpu_custom_call.1} parent=0
    #allocation2 [shape = 'u8[4096]{0}', space=vmem, size = 0x1000, scoped, tag = 'input window, operand 0, single buffered']
    #allocation3 [shape = 's32[1]{0}', space=sflag, size = 0x4, scoped, tag = 'scoped memory for tpu_custom_call.1']
    #allocation4 [shape = 's32[1]{0}', space=sflag, size = 0x4, scoped, tag = 'scoped memory for tpu_custom_call.1']
    #allocation5 [shape = 'u8[4096]{0}', space=vmem, size = 0x1000, scoped, tag = 'output window, operand 0, single buffered']
    %6 = vsyncpa [#allocation3], 0
    %7 = vsyncpa [#allocation4], 0
    // Predicated region
    $region2: #{tpu_custom_call.1} parent=1 // pred_check
      _
    $region3: #{tpu_custom_call.1} parent=1 // pred_check_branch
      %9 = sbr.rel (0) target = $region5
    $region4: #{tpu_custom_call.1} parent=1 // pred_region
      %s11 = ssub.s32 128, 128
      %12 = vsyncadd [#allocation3], %s11
      %s14 = sshll.u32 [#allocation2], 4
      %s15 = int_to_ptr.vmem [resolvable:$true] %s14
      %17 = dma.hbm_to_vmem [thread:$0]  %s0, 128, %s15, [#allocation3]
    $region5: #{tpu_custom_call.1} parent=1 // pred_fallthru
      _
    // Predicated region
    $region6: #{tpu_custom_call.1} parent=1 // pred_check
      _
    $region7: #{tpu_custom_call.1} parent=1 // pred_check_branch
      %19 = sbr.rel (0) target = $region9
    $region8: #{tpu_custom_call.1} parent=1 // pred_region
      %20 = dma.done [#allocation3], 128
    $region9: #{tpu_custom_call.1} parent=1 // pred_fallthru
      _
    %v21 = vld [vmem:[#allocation2] sm:$0xff]
    %v22 = vrot.slane %v21, 7
    %23 = vst [vmem:[#allocation5] sm:$0xff] %v22
    // Predicated region
    $region10: #{tpu_custom_call.1} parent=1 // pred_check
      _
    $region11: #{tpu_custom_call.1} parent=1 // pred_check_branch
      %25 = sbr.rel (0) target = $region13
    $region12: #{tpu_custom_call.1} parent=1 // pred_region
      %s27 = ssub.s32 128, 128
      %28 = vsyncadd [#allocation4], %s27
      %s30 = sshll.u32 [#allocation5], 4
      %s31 = int_to_ptr.vmem [resolvable:$true] %s30
      %33 = dma.vmem_to_hbm [thread:$0]  %s31, 128, %s1, [#allocation4]
    $region13: #{tpu_custom_call.1} parent=1 // pred_fallthru
      _
    // Predicated region
    $region14: #{tpu_custom_call.1} parent=1 // pred_check
      _
    $region15: #{tpu_custom_call.1} parent=1 // pred_check_branch
      %35 = sbr.rel (0) target = $region17
    $region16: #{tpu_custom_call.1} parent=1 // pred_region
      %36 = dma.done [#allocation4], 128
    $region17: #{tpu_custom_call.1} parent=1 // pred_fallthru
      _
    %37 = vsyncpa [#allocation3], 1
    %38 = vsyncpa [#allocation4], 1

</llo_original>
